<compile_context>
chip_gen: v7x
topology: tpu7x:2x2x1
jax: 0.10.0
libtpu: 0.0.40
codegen_flags: <defaults>
</compile_context>

<pallas_src>
import functools

import jax
import jax.numpy as jnp
from jax.experimental import pallas as pl
from jax.experimental.pallas import tpu as pltpu


def _round_up(x, m):
    return ((x + m - 1) // m) * m


def _landmark_kernel(lm_ref, tab_ref, out_ref, *, f2, num_roads, num_junctions):
    lm = lm_ref[...]                                   # (tile_n, F) f32
    feats = lm[:, :f2]                                 # (tile_n, F-2)

    # PyTorch does landmarks[:, -2].to(dtype=torch.int): truncation toward
    # zero.  Clamp into range so an out-of-range id cannot silently produce an
    # all-zero one-hot row (nn.Embedding would raise instead).
    rid = jnp.clip(lm[:, f2:f2 + 1].astype(jnp.int32), 0, num_roads - 1)
    jid = jnp.clip(lm[:, f2 + 1:f2 + 2].astype(jnp.int32), 0, num_junctions - 1)

    # Fused one-hot over the stacked [roads | junctions] vocabulary.
    rj = num_roads + num_junctions
    col = jax.lax.broadcasted_iota(jnp.int32, (lm.shape[0], rj), 1)
    onehot = jnp.logical_or(col == rid, col == jid + num_roads).astype(lm.dtype)

    # Single MXU pass: [feats | onehot] @ [identity ; road_tab ; junc_tab]
    # yields the full lane-padded output tile with the raw features already in
    # place, so the only store is one full-width unmasked store (no second
    # masked f2-lane write).
    operand = jnp.concatenate([feats, onehot], axis=1).astype(tab_ref.dtype)
    out_ref[...] = jnp.dot(
        operand, tab_ref[...], preferred_element_type=jnp.float32
    ).astype(out_ref.dtype)


def build_fused_table(road_table, junction_table, num_feat_cols, *, dtype=jnp.float32):
    """Block-placed [identity ; road ; junction] table.

    Depends only on the (static) embedding weights and the feature width, so
    build it ONCE at init and reuse it across forward calls (hoisted out of
    the per-call path, per the performance review).
    """
    num_roads, e = road_table.shape
    num_junctions, e2 = junction_table.shape
    assert e == e2, "road/junction embeddings must have the same width"
    f2 = num_feat_cols
    out_dim = f2 + 2 * e
    out_pad = _round_up(out_dim, 128)                  # lane-dense output width
    kdim = f2 + num_roads + num_junctions
    tab = jnp.zeros((kdim, out_pad), dtype)
    tab = tab.at[:f2, :f2].set(jnp.eye(f2, dtype=dtype))
    tab = tab.at[f2:f2 + num_roads, f2:f2 + e].set(road_table.astype(dtype))
    tab = tab.at[f2 + num_roads:, f2 + e:f2 + 2 * e].set(junction_table.astype(dtype))
    return tab


def landmark_encoder(landmarks, road_table, junction_table, *, fused_table=None,
                     tile_n=None, out_dtype=None, trim=True):
    """landmarks: (N, F) float, last two cols = (road_id, junction_id)."""
    n, f = landmarks.shape
    f2 = f - 2
    num_roads, e = road_table.shape
    num_junctions, _ = junction_table.shape
    out_dim = f2 + 2 * e

    if fused_table is None:                            # prefer prebuilding at init
        fused_table = build_fused_table(road_table, junction_table, f2)
    kdim, out_pad = fused_table.shape
    if out_dtype is None:
        out_dtype = fused_table.dtype
    itemsize = jnp.dtype(out_dtype).itemsize
    pack = max(8, 32 // itemsize)                      # sublane pack: 8 f32, 16 bf16

    if tile_n is None:
        # >=4 grid steps when possible (v7x megacore), big tiles to amortize
        # per-step overhead, and keep 2 x tile_n x out_pad output buffers well
        # inside VMEM (~8 MiB budget).
        target = _round_up(max(1, -(-n // 4)), pack)
        vmem_rows = max(pack, ((8 * 1024 * 1024) // (2 * out_pad * itemsize))
                        // pack * pack)
        tile_n = int(min(2048, vmem_rows, target))
    if tile_n >= n:
        tile_n = n                                     # single full-dim block
    grid = (pl.cdiv(n, tile_n),)                       # ragged tail handled by Pallas

    lm = landmarks if landmarks.dtype == jnp.float32 else landmarks.astype(jnp.float32)

    kernel = functools.partial(
        _landmark_kernel, f2=f2, num_roads=num_roads, num_junctions=num_junctions)

    def run(table_spec):
        out = pl.pallas_call(
            kernel,
            out_shape=jax.ShapeDtypeStruct((n, out_pad), out_dtype),
            grid=grid,
            in_specs=[
                pl.BlockSpec((tile_n, f), lambda i: (i, 0)),   # landmark row tile
                table_spec,                                    # VMEM-resident table
            ],
            out_specs=pl.BlockSpec((tile_n, out_pad), lambda i: (i, 0)),
            compiler_params=pltpu.CompilerParams(
                dimension_semantics=("parallel",),
                vmem_limit_bytes=48 * 1024 * 1024,   # safe on v5e/v6e, < v7x 64 MiB
            ),
        )(lm, fused_table)
        return jax.block_until_ready(out)

    try:
        # Constant index_map: single-buffering the table halves its VMEM cost.
        out = run(pl.BlockSpec((kdim, out_pad), lambda i: (0, 0),
                               pipeline_mode=pl.Buffered(buffer_count=1)))
    except Exception:
        # Graceful fallback if pipeline_mode/Buffered(1) is unsupported.
        out = run(pl.BlockSpec((kdim, out_pad), lambda i: (0, 0)))

    if trim:
        # Column slice costs an extra HBM pass on a store-bound op; pass
        # trim=False to keep the lane-padded (N, out_pad) layout for consumers.
        out = out[:, :out_dim]
    return out


def _reference(landmarks, road_table, junction_table):
    n, f = landmarks.shape
    feats = landmarks[:, : f - 2]
    rid = landmarks[:, f - 2].astype(jnp.int32)        # trunc toward zero, like .to(int)
    jid = landmarks[:, f - 1].astype(jnp.int32)
    return jnp.concatenate([feats, road_table[rid], junction_table[jid]], axis=1)


if __name__ == "__main__":
    key = jax.random.PRNGKey(0)
    k_feat, k_rid, k_jid, k_road, k_junc = jax.random.split(key, 5)

    # Small, module-consistent shapes.
    N = 8              # number of landmarks
    F = 6              # per-landmark list length (4 features + road_id + junction_id)
    E = 8              # embedding num_feature
    NUM_ROADS = 16
    NUM_JUNCTIONS = 12
    OUT_DIM = (F - 2) + 2 * E

    feats = jax.random.normal(k_feat, (N, F - 2), dtype=jnp.float32)
    road_ids = jax.random.randint(k_rid, (N,), 0, NUM_ROADS).astype(jnp.float32)
    junc_ids = jax.random.randint(k_jid, (N,), 0, NUM_JUNCTIONS).astype(jnp.float32)
    # Landmark rows exactly like Landmark.to_list(): features..., road_id, junction_id.
    landmarks = jnp.concatenate(
        [feats, road_ids[:, None], junc_ids[:, None]], axis=1)

    # Deterministic synthetic embedding tables (nn.Embedding weights).
    road_table = jax.random.normal(k_road, (NUM_ROADS, E), dtype=jnp.float32)
    junction_table = jax.random.normal(k_junc, (NUM_JUNCTIONS, E), dtype=jnp.float32)

    ref = _reference(landmarks, road_table, junction_table)

    # f32 path: fused table built ONCE at "init", reused per forward call.
    table_f32 = build_fused_table(road_table, junction_table, F - 2, dtype=jnp.float32)
    out = landmark_encoder(landmarks, road_table, junction_table,
                           fused_table=table_f32)
    out = jax.block_until_ready(out)
    assert out.shape == (N, OUT_DIM), out.shape
    assert jnp.allclose(out, ref, atol=1e-5), "f32 mismatch vs reference"

    # bf16 store path (halves HBM write traffic, f32 accumulation), keeping the
    # lane-padded output layout for the consumer (no slice copy).
    table_bf16 = build_fused_table(road_table, junction_table, F - 2,
                                   dtype=jnp.bfloat16)
    out_bf16 = landmark_encoder(landmarks, road_table, junction_table,
                                fused_table=table_bf16, out_dtype=jnp.bfloat16,
                                trim=False)
    out_bf16 = jax.block_until_ready(out_bf16)
    assert out_bf16.shape == (N, 128), out_bf16.shape
    assert jnp.allclose(out_bf16[:, :OUT_DIM].astype(jnp.float32), ref,
                        atol=5e-2, rtol=5e-2), "bf16 mismatch vs reference"

    print("KERNEL_OK")
</pallas_src>

<mosaic_0001>
module attributes {stable_mosaic.version = 11 : i64} {
  func.func @_landmark_kernel(%arg0: i32, %arg1: memref<8x6xf32, #tpu.memory_space<vmem>>, %arg2: memref<32x128xf32, #tpu.memory_space<vmem>>, %arg3: memref<8x128xf32, #tpu.memory_space<vmem>>) attributes {dimension_semantics = [#tpu.dimension_semantics<parallel>], iteration_bounds = array<i64: 1>, scalar_prefetch = 0 : i64, scratch_operands = 0 : i64, tpu.core_type = #tpu.core_type<tc>, window_params = [{transform_indices = @transform_0, window_bounds = array<i64: 8, 6>}, {pipeline_mode = #tpu.pipeline_mode<synchronous>, transform_indices = @transform_1, window_bounds = array<i64: 32, 128>}, {transform_indices = @transform_2, window_bounds = array<i64: 8, 128>}]} {
    %c0 = arith.constant 0 : index
    %c0_0 = arith.constant 0 : index
    %0 = vector.load %arg1[%c0, %c0_0] : memref<8x6xf32, #tpu.memory_space<vmem>>, vector<8x6xf32>
    %1 = vector.extract_strided_slice %0 {offsets = [0, 0], sizes = [8, 4], strides = [1, 1]} : vector<8x6xf32> to vector<8x4xf32>
    %2 = vector.extract_strided_slice %0 {offsets = [0, 4], sizes = [8, 1], strides = [1, 1]} : vector<8x6xf32> to vector<8x1xf32>
    %3 = arith.fptosi %2 : vector<8x1xf32> to vector<8x1xi32>
    %c0_i32 = arith.constant 0 : i32
    %c15_i32 = arith.constant 15 : i32
    %4 = vector.broadcast %c0_i32 : i32 to vector<8x1xi32>
    %5 = arith.maxsi %4, %3 : vector<8x1xi32>
    %6 = vector.broadcast %c15_i32 : i32 to vector<8x1xi32>
    %7 = arith.minsi %6, %5 : vector<8x1xi32>
    %8 = vector.extract_strided_slice %0 {offsets = [0, 5], sizes = [8, 1], strides = [1, 1]} : vector<8x6xf32> to vector<8x1xf32>
    %9 = arith.fptosi %8 : vector<8x1xf32> to vector<8x1xi32>
    %c0_i32_1 = arith.constant 0 : i32
    %c11_i32 = arith.constant 11 : i32
    %10 = vector.broadcast %c0_i32_1 : i32 to vector<8x1xi32>
    %11 = arith.maxsi %10, %9 : vector<8x1xi32>
    %12 = vector.broadcast %c11_i32 : i32 to vector<8x1xi32>
    %13 = arith.minsi %12, %11 : vector<8x1xi32>
    %14 = tpu.iota {dimensions = array<i32: 1>} : vector<8x28xi32>
    %15 = vector.broadcast %7 : vector<8x1xi32> to vector<8x28xi32>
    %16 = arith.cmpi eq, %14, %15 : vector<8x28xi32>
    %c16_i32 = arith.constant 16 : i32
    %17 = vector.broadcast %c16_i32 : i32 to vector<8x1xi32>
    %18 = arith.addi %13, %17 : vector<8x1xi32>
    %19 = vector.broadcast %18 : vector<8x1xi32> to vector<8x28xi32>
    %20 = arith.cmpi eq, %14, %19 : vector<8x28xi32>
    %21 = arith.ori %16, %20 : vector<8x28xi1>
    %22 = arith.extui %21 : vector<8x28xi1> to vector<8x28xi32>
    %23 = arith.sitofp %22 : vector<8x28xi32> to vector<8x28xf32>
    %24 = tpu.concatenate %1, %23 in 1 : vector<8x4xf32>, vector<8x28xf32> -> vector<8x32xf32>
    %c0_2 = arith.constant 0 : index
    %c0_3 = arith.constant 0 : index
    %25 = vector.load %arg2[%c0_2, %c0_3] : memref<32x128xf32, #tpu.memory_space<vmem>>, vector<32x128xf32>
    %cst = arith.constant dense<0.000000e+00> : vector<8x128xf32>
    %26 = tpu.matmul %24, %25, %cst {dimension_numbers = #tpu.dot_dimension_numbers<[1], [0], [0], [1], [0, 0, 1, 1], [], []>} : vector<8x32xf32>, vector<32x128xf32>, vector<8x128xf32> -> vector<8x128xf32>
    %c0_4 = arith.constant 0 : index
    %c0_5 = arith.constant 0 : index
    %27 = vector.load %arg3[%c0_4, %c0_5] : memref<8x128xf32, #tpu.memory_space<vmem>>, vector<8x128xf32>
    tpu.vector_store %arg3[%c0_4, %c0_5], %26 {strides = array<i32>} : memref<8x128xf32, #tpu.memory_space<vmem>>, vector<8x128xf32>,
    return
  }
  func.func @transform_0(%arg0: i32) -> (i32, i32) {
    %c0_i32 = arith.constant 0 : i32
    %c0_i32_0 = arith.constant 0 : i32
    return %arg0, %c0_i32 : i32, i32
  }
  func.func @transform_1(%arg0: i32) -> (i32, i32) {
    %c0_i32 = arith.constant 0 : i32
    %c0_i32_0 = arith.constant 0 : i32
    %c0_i32_1 = arith.constant 0 : i32
    return %c0_i32, %c0_i32_0 : i32, i32
  }
  func.func @transform_2(%arg0: i32) -> (i32, i32) {
    %c0_i32 = arith.constant 0 : i32
    %c0_i32_0 = arith.constant 0 : i32
    return %arg0, %c0_i32 : i32, i32
  }
}

module attributes {stable_mosaic.version = 11 : i64} {
  func.func @_landmark_kernel(%arg0: i32, %arg1: memref<8x6xf32, #tpu.memory_space<vmem>>, %arg2: memref<32x128xf32, #tpu.memory_space<vmem>>, %arg3: memref<8x128xf32, #tpu.memory_space<vmem>>) attributes {dimension_semantics = [#tpu.dimension_semantics<parallel>], iteration_bounds = array<i64: 1>, scalar_prefetch = 0 : i64, scratch_operands = 0 : i64, tpu.core_type = #tpu.core_type<tc>, window_params = [{transform_indices = @transform_0, window_bounds = array<i64: 8, 6>}, {pipeline_mode = #tpu.pipeline_mode<synchronous>, transform_indices = @transform_1, window_bounds = array<i64: 32, 128>}, {transform_indices = @transform_2, window_bounds = array<i64: 8, 128>}]} {
    %c0 = arith.constant 0 : index
    %c0_0 = arith.constant 0 : index
    %0 = vector.load %arg1[%c0, %c0_0] : memref<8x6xf32, #tpu.memory_space<vmem>>, vector<8x6xf32>
    %1 = vector.extract_strided_slice %0 {offsets = [0, 0], sizes = [8, 4], strides = [1, 1]} : vector<8x6xf32> to vector<8x4xf32>
    %2 = vector.extract_strided_slice %0 {offsets = [0, 4], sizes = [8, 1], strides = [1, 1]} : vector<8x6xf32> to vector<8x1xf32>
    %3 = arith.fptosi %2 : vector<8x1xf32> to vector<8x1xi32>
    %c0_i32 = arith.constant 0 : i32
    %c15_i32 = arith.constant 15 : i32
    %4 = vector.broadcast %c0_i32 : i32 to vector<8x1xi32>
    %5 = arith.maxsi %4, %3 : vector<8x1xi32>
    %6 = vector.broadcast %c15_i32 : i32 to vector<8x1xi32>
    %7 = arith.minsi %6, %5 : vector<8x1xi32>
    %8 = vector.extract_strided_slice %0 {offsets = [0, 5], sizes = [8, 1], strides = [1, 1]} : vector<8x6xf32> to vector<8x1xf32>
    %9 = arith.fptosi %8 : vector<8x1xf32> to vector<8x1xi32>
    %c0_i32_1 = arith.constant 0 : i32
    %c11_i32 = arith.constant 11 : i32
    %10 = vector.broadcast %c0_i32_1 : i32 to vector<8x1xi32>
    %11 = arith.maxsi %10, %9 : vector<8x1xi32>
    %12 = vector.broadcast %c11_i32 : i32 to vector<8x1xi32>
    %13 = arith.minsi %12, %11 : vector<8x1xi32>
    %14 = tpu.iota {dimensions = array<i32: 1>} : vector<8x28xi32>
    %15 = vector.broadcast %7 : vector<8x1xi32> to vector<8x28xi32>
    %16 = arith.cmpi eq, %14, %15 : vector<8x28xi32>
    %c16_i32 = arith.constant 16 : i32
    %17 = vector.broadcast %c16_i32 : i32 to vector<8x1xi32>
    %18 = arith.addi %13, %17 : vector<8x1xi32>
    %19 = vector.broadcast %18 : vector<8x1xi32> to vector<8x28xi32>
    %20 = arith.cmpi eq, %14, %19 : vector<8x28xi32>
    %21 = arith.ori %16, %20 : vector<8x28xi1>
    %22 = arith.extui %21 : vector<8x28xi1> to vector<8x28xi32>
    %23 = arith.sitofp %22 : vector<8x28xi32> to vector<8x28xf32>
    %24 = tpu.concatenate %1, %23 in 1 : vector<8x4xf32>, vector<8x28xf32> -> vector<8x32xf32>
    %c0_2 = arith.constant 0 : index
    %c0_3 = arith.constant 0 : index
    %25 = vector.load %arg2[%c0_2, %c0_3] : memref<32x128xf32, #tpu.memory_space<vmem>>, vector<32x128xf32>
    %cst = arith.constant dense<0.000000e+00> : vector<8x128xf32>
    %26 = tpu.matmul %24, %25, %cst {dimension_numbers = #tpu.dot_dimension_numbers<[1], [0], [0], [1], [0, 0, 1, 1], [], []>} : vector<8x32xf32>, vector<32x128xf32>, vector<8x128xf32> -> vector<8x128xf32>
    %c0_4 = arith.constant 0 : index
    %c0_5 = arith.constant 0 : index
    %27 = vector.load %arg3[%c0_4, %c0_5] : memref<8x128xf32, #tpu.memory_space<vmem>>, vector<8x128xf32>
    tpu.vector_store %arg3[%c0_4, %c0_5], %26 {strides = array<i32>} : memref<8x128xf32, #tpu.memory_space<vmem>>, vector<8x128xf32>,
    return
  }
  func.func @transform_0(%arg0: i32) -> (i32, i32) {
    %c0_i32 = arith.constant 0 : i32
    %c0_i32_0 = arith.constant 0 : i32
    return %arg0, %c0_i32 : i32, i32
  }
  func.func @transform_1(%arg0: i32) -> (i32, i32) {
    %c0_i32 = arith.constant 0 : i32
    %c0_i32_0 = arith.constant 0 : i32
    %c0_i32_1 = arith.constant 0 : i32
    return %c0_i32, %c0_i32_0 : i32, i32
  }
  func.func @transform_2(%arg0: i32) -> (i32, i32) {
    %c0_i32 = arith.constant 0 : i32
    %c0_i32_0 = arith.constant 0 : i32
    return %arg0, %c0_i32 : i32, i32
  }
}

</mosaic_0001>

<llo_original>
// kernel: tpu_custom_call.1
$region0: #{tpu_custom_call.1}
  #allocation0 [shape = 'u32[]', space=smem, size = 0x4, offset = 0x4, fixed_abs, tag = 'smem constant byte address 0x4 - core index']
  #allocation1 [shape = 'u32[144,128]{1,0:T(1,128)}', space=vmem, size = 0x12000, scoped, tag = 'internal scratch']
  %s0 = inlined_call_operand.hbm [shape: f32[8,6], index: 0, kind: input, shape index: {}]
  %s1 = inlined_call_operand.hbm [shape: f32[32,128], index: 1, kind: input, shape index: {}]
  %s2 = inlined_call_operand.hbm [shape: f32[8,128], index: 2, kind: output, shape index: {}]
  %s3 = sld [smem:[#allocation0]]
  $region26: #{tpu_custom_call.1} parent=0
    _
  %s5 = ssub.s32 1, %s3
  %s6 = scalar_select 0, %s5, %s3
  $region1: #{tpu_custom_call.1} parent=0
    #allocation2 [shape = 'u8[4096]{0}', space=vmem, size = 0x1000, scoped, tag = 'input window, operand 0, single buffered']
    #allocation3 [shape = 's32[1]{0}', space=sflag, size = 0x4, scoped, tag = 'scoped memory for tpu_custom_call.1']
    #allocation4 [shape = 's32[1]{0}', space=sflag, size = 0x4, scoped, tag = 'scoped memory for tpu_custom_call.1']
    #allocation5 [shape = 'u8[16384]{0}', space=vmem, size = 0x4000, scoped, tag = 'input window, operand 1, single buffered']
    #allocation6 [shape = 's32[1]{0}', space=sflag, size = 0x4, scoped, tag = 'scoped memory for tpu_custom_call.1']
    #allocation7 [shape = 'u8[4096]{0}', space=vmem, size = 0x1000, scoped, tag = 'output window, operand 0, single buffered']
    %7 = vsyncpa [#allocation3], 0
    %8 = vsyncpa [#allocation6], 0
    %9 = vsyncpa [#allocation4], 0
    // Predicated region
    $region2: #{tpu_custom_call.1} parent=1 // pred_check
      _
    $region3: #{tpu_custom_call.1} parent=1 // pred_check_branch
      %11 = sbr.rel (0) target = $region5
    $region4: #{tpu_custom_call.1} parent=1 // pred_region
      %s13 = ssub.s32 128, 128
      %14 = vsyncadd [#allocation3], %s13
      %s16 = sshll.u32 [#allocation2], 4
      %s17 = int_to_ptr.vmem [resolvable:$true] %s16
      %19 = dma.hbm_to_vmem [thread:$0]  %s0, 128, %s17, [#allocation3]
    $region5: #{tpu_custom_call.1} parent=1 // pred_fallthru
      _
    // Predicated region
    $region6: #{tpu_custom_call.1} parent=1 // pred_check
      _
    $region7: #{tpu_custom_call.1} parent=1 // pred_check_branch
      %21 = sbr.rel (0) target = $region9
    $region8: #{tpu_custom_call.1} parent=1 // pred_region
      %s23 = ssub.s32 512, 512
      %24 = vsyncadd [#allocation6], %s23
      %s25 = sshll.u32 [#allocation5], 4
      %s26 = int_to_ptr.vmem [resolvable:$true] %s25
      %31 = dma.hbm_to_vmem [thread:$0]  %s1, 512, %s26, [#allocation6], 128, 128, 8
    $region9: #{tpu_custom_call.1} parent=1 // pred_fallthru
      _
    // Predicated region
    $region10: #{tpu_custom_call.1} parent=1 // pred_check
      _
    $region11: #{tpu_custom_call.1} parent=1 // pred_check_branch
      %33 = sbr.rel (0) target = $region13
    $region12: #{tpu_custom_call.1} parent=1 // pred_region
      %34 = dma.done [#allocation3], 128
    $region13: #{tpu_custom_call.1} parent=1 // pred_fallthru
      _
    // Predicated region
    $region14: #{tpu_custom_call.1} parent=1 // pred_check
      _
    $region15: #{tpu_custom_call.1} parent=1 // pred_check_branch
      %36 = sbr.rel (0) target = $region17
    $region16: #{tpu_custom_call.1} parent=1 // pred_region
      %37 = dma.done [#allocation6], 512
    $region17: #{tpu_custom_call.1} parent=1 // pred_fallthru
      _
    %v38 = vld [vmem:[#allocation2] sm:$0xff]
    %v39 = vcvt.f32.s32.to.zero.pseudo %v38
    %vm40 = vcmp.gt.s32.totalorder %v39, 0
    %v41 = vsel %vm40, %v39, 0
    %vm42 = vcmp.lt.s32.totalorder %v41, 15
    %v43 = vsel %vm42, %v41, 15
    %vm44 = vcmp.lt.s32.totalorder %v41, 11
    %v45 = vsel %vm44, %v41, 11
    %v46 = vlaneseq
    %v47 = vand.u32 %v46, 127
    %48 = vset.pattern.permute.xlu0 4
    %49 = vperm.xlu0 %48, %v43
    %v50 = vpop.permute.xlu0 %49
    %vm51 = vcmp.eq.s32.totalorder %v47, %v50
    %v52 = vadd.s32 %v45, 16
    %53 = vset.pattern.permute.xlu0 5
    %54 = vperm.xlu0 %53, %v52
    %v55 = vpop.permute.xlu0 %54
    %vm56 = vcmp.eq.s32.totalorder %v47, %v55
    %vm57 = vmor %vm51, %vm56
    %v58 = vsel %vm57, 1, 0
    %v59 = vcvt.s32.f32 %v58
    %61 = vrot.lane.b32.xlu0 %v59, 4
    %v62 = vpop.permute.xlu0 %61
    %vm64 = vcmask 31744
    %v65 = vsel %vm64, %v38, %v62
    %v66 = vld [vmem:[#allocation5] sm:$0xff]
    %v67 = vld [vmem:[#allocation5 + $0x8] sm:$0xff]
    %v68 = vld [vmem:[#allocation5 + $0x10] sm:$0xff]
    %v69 = vld [vmem:[#allocation5 + $0x18] sm:$0xff]
    %vm70 = vcmask 261120
    %v72 = vsel %vm70, %v65, 0
    %74 = vmatprep.subr.mxu0 0.0
    %75 = vmatpush1.msra.mxu0 %v66
    %76 = vmatprep.subr.mxu0 0.0
    %77 = vmatpush1.msra.mxu0 %v67
    %78 = vmatprep.subr.mxu0 0.0
    %79 = vmatpush1.msra.mxu0 %v68
    %80 = vmatprep.subr.mxu0 0.0
    %81 = vmatpush1.msra.mxu0 %v69
    %82 = vmatprep.subr.mxu0 0.0
    %83 = vmatpush1.msra.mxu0 0.0
    %84 = vmatprep.subr.mxu0 0.0
    %85 = vmatpush1.msra.mxu0 0.0
    %86 = vmatprep.subr.mxu0 0.0
    %87 = vmatpush1.msra.mxu0 0.0
    %88 = vmatprep.subr.mxu0 0.0
    %89 = vmatpush1.msra.mxu0 0.0
    %90 = vmatprep.subr.mxu0 0.0
    %91 = vmatpush1.msra.mxu0 0.0
    %92 = vmatprep.subr.mxu0 0.0
    %93 = vmatpush1.msra.mxu0 0.0
    %94 = vmatprep.subr.mxu0 0.0
    %95 = vmatpush1.msra.mxu0 0.0
    %96 = vmatprep.subr.mxu0 0.0
    %97 = vmatpush1.msra.mxu0 0.0
    %98 = vmatprep.subr.mxu0 0.0
    %99 = vmatpush1.msra.mxu0 0.0
    %100 = vmatprep.subr.mxu0 0.0
    %101 = vmatpush1.msra.mxu0 0.0
    %102 = vmatprep.subr.mxu0 0.0
    %103 = vmatpush1.msra.mxu0 0.0
    %104 = vmatprep.subr.mxu0 0.0
    %105 = vmatpush1.msra.mxu0 0.0
    %106 = vmatprep.subr.mxu0 0.0
    %107 = vmatpush1.msra.mxu0 0.0
    %108 = vmatprep.subr.mxu0 0.0
    %109 = vmatpush1.msra.mxu0 0.0
    %110 = vmatprep.subr.mxu0 0.0
    %111 = vmatpush1.msra.mxu0 0.0
    %112 = vmatprep.subr.mxu0 0.0
    %113 = vmatpush1.msra.mxu0 0.0
    %114 = vmatprep.subr.mxu0 0.0
    %115 = vmatpush1.msra.mxu0 0.0
    %116 = vmatprep.subr.mxu0 0.0
    %117 = vmatpush1.msra.mxu0 0.0
    %118 = vmatprep.subr.mxu0 0.0
    %119 = vmatpush1.msra.mxu0 0.0
    %120 = vmatprep.subr.mxu0 0.0
    %121 = vmatpush1.msra.mxu0 0.0
    %122 = vmatprep.subr.mxu0 0.0
    %123 = vmatpush1.msra.mxu0 0.0
    %124 = vmatprep.subr.mxu0 0.0
    %125 = vmatpush1.msra.mxu0 0.0
    %126 = vmatprep.subr.mxu0 0.0
    %127 = vmatpush1.msra.mxu0 0.0
    %128 = vmatprep.subr.mxu0 0.0
    %129 = vmatpush1.msra.mxu0 0.0
    %130 = vmatprep.subr.mxu0 0.0
    %131 = vmatpush1.msra.mxu0 0.0
    %132 = vmatprep.subr.mxu0 0.0
    %133 = vmatpush1.msra.mxu0 0.0
    %134 = vmatprep.subr.mxu0 0.0
    %135 = vmatpush1.msra.mxu0 0.0
    %136 = vmatprep.subr.mxu0 0.0
    %137 = vmatpush1.msra.mxu0 0.0
    %138 = vmatprep.mubr.f32.mxu0 0.0
    %139 = vmatmul.mubr.f32.gmra.mrb[0].mxu0 %v72
    %v140 = vpop.f32.mrb[0].mxu0
    %v141 = vadd.f32 0.0, %v140
    %v142 = vpop.f32.mrb[0].mxu0
    %143 = vdwg.mxu0
    %144 = vst [vmem:[#allocation7] sm:$0xff] %v141
    // Predicated region
    $region18: #{tpu_custom_call.1} parent=1 // pred_check
      _
    $region19: #{tpu_custom_call.1} parent=1 // pred_check_branch
      %146 = sbr.rel (0) target = $region21
    $region20: #{tpu_custom_call.1} parent=1 // pred_region
      %s148 = ssub.s32 128, 128
      %149 = vsyncadd [#allocation4], %s148
      %s151 = sshll.u32 [#allocation7], 4
      %s152 = int_to_ptr.vmem [resolvable:$true] %s151
      %154 = dma.vmem_to_hbm [thread:$0]  %s152, 128, %s2, [#allocation4]
    $region21: #{tpu_custom_call.1} parent=1 // pred_fallthru
      _
    // Predicated region
    $region22: #{tpu_custom_call.1} parent=1 // pred_check
      _
    $region23: #{tpu_custom_call.1} parent=1 // pred_check_branch
      %156 = sbr.rel (0) target = $region25
    $region24: #{tpu_custom_call.1} parent=1 // pred_region
      %157 = dma.done [#allocation4], 128
    $region25: #{tpu_custom_call.1} parent=1 // pred_fallthru
      _
    %158 = vsyncpa [#allocation3], 1
    %159 = vsyncpa [#allocation6], 1
    %160 = vsyncpa [#allocation4], 1

// kernel: tpu_custom_call.1
$region0: #{tpu_custom_call.1}
  #allocation0 [shape = 'u32[]', space=smem, size = 0x4, offset = 0x4, fixed_abs, tag = 'smem constant byte address 0x4 - core index']
  #allocation1 [shape = 'u32[144,128]{1,0:T(1,128)}', space=vmem, size = 0x12000, scoped, tag = 'internal scratch']
  %s0 = inlined_call_operand.hbm [shape: f32[8,6], index: 0, kind: input, shape index: {}]
  %s1 = inlined_call_operand.hbm [shape: f32[32,128], index: 1, kind: input, shape index: {}]
  %s2 = inlined_call_operand.hbm [shape: f32[8,128], index: 2, kind: output, shape index: {}]
  %s3 = sld [smem:[#allocation0]]
  $region26: #{tpu_custom_call.1} parent=0
    _
  %s5 = ssub.s32 1, %s3
  %s6 = scalar_select 0, %s5, %s3
  $region1: #{tpu_custom_call.1} parent=0
    #allocation2 [shape = 'u8[4096]{0}', space=vmem, size = 0x1000, scoped, tag = 'input window, operand 0, single buffered']
    #allocation3 [shape = 's32[1]{0}', space=sflag, size = 0x4, scoped, tag = 'scoped memory for tpu_custom_call.1']
    #allocation4 [shape = 's32[1]{0}', space=sflag, size = 0x4, scoped, tag = 'scoped memory for tpu_custom_call.1']
    #allocation5 [shape = 'u8[16384]{0}', space=vmem, size = 0x4000, scoped, tag = 'input window, operand 1, single buffered']
    #allocation6 [shape = 's32[1]{0}', space=sflag, size = 0x4, scoped, tag = 'scoped memory for tpu_custom_call.1']
    #allocation7 [shape = 'u8[4096]{0}', space=vmem, size = 0x1000, scoped, tag = 'output window, operand 0, single buffered']
    %7 = vsyncpa [#allocation3], 0
    %8 = vsyncpa [#allocation6], 0
    %9 = vsyncpa [#allocation4], 0
    // Predicated region
    $region2: #{tpu_custom_call.1} parent=1 // pred_check
      _
    $region3: #{tpu_custom_call.1} parent=1 // pred_check_branch
      %11 = sbr.rel (0) target = $region5
    $region4: #{tpu_custom_call.1} parent=1 // pred_region
      %s13 = ssub.s32 128, 128
      %14 = vsyncadd [#allocation3], %s13
      %s16 = sshll.u32 [#allocation2], 4
      %s17 = int_to_ptr.vmem [resolvable:$true] %s16
      %19 = dma.hbm_to_vmem [thread:$0]  %s0, 128, %s17, [#allocation3]
    $region5: #{tpu_custom_call.1} parent=1 // pred_fallthru
      _
    // Predicated region
    $region6: #{tpu_custom_call.1} parent=1 // pred_check
      _
    $region7: #{tpu_custom_call.1} parent=1 // pred_check_branch
      %21 = sbr.rel (0) target = $region9
    $region8: #{tpu_custom_call.1} parent=1 // pred_region
      %s23 = ssub.s32 512, 512
      %24 = vsyncadd [#allocation6], %s23
      %s25 = sshll.u32 [#allocation5], 4
      %s26 = int_to_ptr.vmem [resolvable:$true] %s25
      %31 = dma.hbm_to_vmem [thread:$0]  %s1, 512, %s26, [#allocation6], 128, 128, 8
    $region9: #{tpu_custom_call.1} parent=1 // pred_fallthru
      _
    // Predicated region
    $region10: #{tpu_custom_call.1} parent=1 // pred_check
      _
    $region11: #{tpu_custom_call.1} parent=1 // pred_check_branch
      %33 = sbr.rel (0) target = $region13
    $region12: #{tpu_custom_call.1} parent=1 // pred_region
      %34 = dma.done [#allocation3], 128
    $region13: #{tpu_custom_call.1} parent=1 // pred_fallthru
      _
    // Predicated region
    $region14: #{tpu_custom_call.1} parent=1 // pred_check
      _
    $region15: #{tpu_custom_call.1} parent=1 // pred_check_branch
      %36 = sbr.rel (0) target = $region17
    $region16: #{tpu_custom_call.1} parent=1 // pred_region
      %37 = dma.done [#allocation6], 512
    $region17: #{tpu_custom_call.1} parent=1 // pred_fallthru
      _
    %v38 = vld [vmem:[#allocation2] sm:$0xff]
    %v39 = vcvt.f32.s32.to.zero.pseudo %v38
    %vm40 = vcmp.gt.s32.totalorder %v39, 0
    %v41 = vsel %vm40, %v39, 0
    %vm42 = vcmp.lt.s32.totalorder %v41, 15
    %v43 = vsel %vm42, %v41, 15
    %vm44 = vcmp.lt.s32.totalorder %v41, 11
    %v45 = vsel %vm44, %v41, 11
    %v46 = vlaneseq
    %v47 = vand.u32 %v46, 127
    %48 = vset.pattern.permute.xlu0 4
    %49 = vperm.xlu0 %48, %v43
    %v50 = vpop.permute.xlu0 %49
    %vm51 = vcmp.eq.s32.totalorder %v47, %v50
    %v52 = vadd.s32 %v45, 16
    %53 = vset.pattern.permute.xlu0 5
    %54 = vperm.xlu0 %53, %v52
    %v55 = vpop.permute.xlu0 %54
    %vm56 = vcmp.eq.s32.totalorder %v47, %v55
    %vm57 = vmor %vm51, %vm56
    %v58 = vsel %vm57, 1, 0
    %v59 = vcvt.s32.f32 %v58
    %61 = vrot.lane.b32.xlu0 %v59, 4
    %v62 = vpop.permute.xlu0 %61
    %vm64 = vcmask 31744
    %v65 = vsel %vm64, %v38, %v62
    %v66 = vld [vmem:[#allocation5] sm:$0xff]
    %v67 = vld [vmem:[#allocation5 + $0x8] sm:$0xff]
    %v68 = vld [vmem:[#allocation5 + $0x10] sm:$0xff]
    %v69 = vld [vmem:[#allocation5 + $0x18] sm:$0xff]
    %vm70 = vcmask 261120
    %v72 = vsel %vm70, %v65, 0
    %74 = vmatprep.subr.mxu0 0.0
    %75 = vmatpush1.msra.mxu0 %v66
    %76 = vmatprep.subr.mxu0 0.0
    %77 = vmatpush1.msra.mxu0 %v67
    %78 = vmatprep.subr.mxu0 0.0
    %79 = vmatpush1.msra.mxu0 %v68
    %80 = vmatprep.subr.mxu0 0.0
    %81 = vmatpush1.msra.mxu0 %v69
    %82 = vmatprep.subr.mxu0 0.0
    %83 = vmatpush1.msra.mxu0 0.0
    %84 = vmatprep.subr.mxu0 0.0
    %85 = vmatpush1.msra.mxu0 0.0
    %86 = vmatprep.subr.mxu0 0.0
    %87 = vmatpush1.msra.mxu0 0.0
    %88 = vmatprep.subr.mxu0 0.0
    %89 = vmatpush1.msra.mxu0 0.0
    %90 = vmatprep.subr.mxu0 0.0
    %91 = vmatpush1.msra.mxu0 0.0
    %92 = vmatprep.subr.mxu0 0.0
    %93 = vmatpush1.msra.mxu0 0.0
    %94 = vmatprep.subr.mxu0 0.0
    %95 = vmatpush1.msra.mxu0 0.0
    %96 = vmatprep.subr.mxu0 0.0
    %97 = vmatpush1.msra.mxu0 0.0
    %98 = vmatprep.subr.mxu0 0.0
    %99 = vmatpush1.msra.mxu0 0.0
    %100 = vmatprep.subr.mxu0 0.0
    %101 = vmatpush1.msra.mxu0 0.0
    %102 = vmatprep.subr.mxu0 0.0
    %103 = vmatpush1.msra.mxu0 0.0
    %104 = vmatprep.subr.mxu0 0.0
    %105 = vmatpush1.msra.mxu0 0.0
    %106 = vmatprep.subr.mxu0 0.0
    %107 = vmatpush1.msra.mxu0 0.0
    %108 = vmatprep.subr.mxu0 0.0
    %109 = vmatpush1.msra.mxu0 0.0
    %110 = vmatprep.subr.mxu0 0.0
    %111 = vmatpush1.msra.mxu0 0.0
    %112 = vmatprep.subr.mxu0 0.0
    %113 = vmatpush1.msra.mxu0 0.0
    %114 = vmatprep.subr.mxu0 0.0
    %115 = vmatpush1.msra.mxu0 0.0
    %116 = vmatprep.subr.mxu0 0.0
    %117 = vmatpush1.msra.mxu0 0.0
    %118 = vmatprep.subr.mxu0 0.0
    %119 = vmatpush1.msra.mxu0 0.0
    %120 = vmatprep.subr.mxu0 0.0
    %121 = vmatpush1.msra.mxu0 0.0
    %122 = vmatprep.subr.mxu0 0.0
    %123 = vmatpush1.msra.mxu0 0.0
    %124 = vmatprep.subr.mxu0 0.0
    %125 = vmatpush1.msra.mxu0 0.0
    %126 = vmatprep.subr.mxu0 0.0
    %127 = vmatpush1.msra.mxu0 0.0
    %128 = vmatprep.subr.mxu0 0.0
    %129 = vmatpush1.msra.mxu0 0.0
    %130 = vmatprep.subr.mxu0 0.0
    %131 = vmatpush1.msra.mxu0 0.0
    %132 = vmatprep.subr.mxu0 0.0
    %133 = vmatpush1.msra.mxu0 0.0
    %134 = vmatprep.subr.mxu0 0.0
    %135 = vmatpush1.msra.mxu0 0.0
    %136 = vmatprep.subr.mxu0 0.0
    %137 = vmatpush1.msra.mxu0 0.0
    %138 = vmatprep.mubr.f32.mxu0 0.0
    %139 = vmatmul.mubr.f32.gmra.mrb[0].mxu0 %v72
    %v140 = vpop.f32.mrb[0].mxu0
    %v141 = vadd.f32 0.0, %v140
    %v142 = vpop.f32.mrb[0].mxu0
    %143 = vdwg.mxu0
    %144 = vst [vmem:[#allocation7] sm:$0xff] %v141
    // Predicated region
    $region18: #{tpu_custom_call.1} parent=1 // pred_check
      _
    $region19: #{tpu_custom_call.1} parent=1 // pred_check_branch
      %146 = sbr.rel (0) target = $region21
    $region20: #{tpu_custom_call.1} parent=1 // pred_region
      %s148 = ssub.s32 128, 128
      %149 = vsyncadd [#allocation4], %s148
      %s151 = sshll.u32 [#allocation7], 4
      %s152 = int_to_ptr.vmem [resolvable:$true] %s151
      %154 = dma.vmem_to_hbm [thread:$0]  %s152, 128, %s2, [#allocation4]
    $region21: #{tpu_custom_call.1} parent=1 // pred_fallthru
      _
    // Predicated region
    $region22: #{tpu_custom_call.1} parent=1 // pred_check
      _
    $region23: #{tpu_custom_call.1} parent=1 // pred_check_branch
      %156 = sbr.rel (0) target = $region25
    $region24: #{tpu_custom_call.1} parent=1 // pred_region
      %157 = dma.done [#allocation4], 128
    $region25: #{tpu_custom_call.1} parent=1 // pred_fallthru
      _
    %158 = vsyncpa [#allocation3], 1
    %159 = vsyncpa [#allocation6], 1
    %160 = vsyncpa [#allocation4], 1

</llo_original>
